<compile_context>
chip_gen: v7x
topology: tpu7x:2x2x1
jax: 0.10.0
libtpu: 0.0.40
codegen_flags: <defaults>
</compile_context>

<pallas_src>
import functools

import jax
import jax.numpy as jnp
from jax import lax
from jax.experimental import pallas as pl
from jax.experimental.pallas import tpu as pltpu

# ----------------------------- configuration ------------------------------
B, S, H, D, V = 2, 8, 4, 32, 64      # batch, seq, heads, hidden, vocab
L_STUDENT = 2                         # student layers
L_TEACHER = 2 * L_STUDENT             # teacher layers (wrapper indexes 2*i+1)
TEMPERATURE = 1.0
LANES = 128
SUBLANES = 8


# ------------------------------- kernel -----------------------------------
def _distill_kernel(hs_ref, ht_ref, hm_ref,          # hidden states + row mask
                    as_ref, at_ref, am_ref,          # attentions (lane-dense) + elem mask
                    sl_ref, tl_ref, lab_ref,         # logits + labels
                    cos_ref, att_ref, kl_ref, nll_ref,
                    *, temperature):
    # ---- masked cosine-embedding loss, all stacked hidden layers ----------
    s = hs_ref[...]                                   # [nLh, R, D]
    t = ht_ref[...]
    hm = hm_ref[...]                                  # [R, 1] (broadcasts over layers)
    dot = jnp.sum(s * t, axis=-1, keepdims=True)      # [nLh, R, 1]
    ss = jnp.sum(s * s, axis=-1, keepdims=True)
    tt = jnp.sum(t * t, axis=-1, keepdims=True)
    eps = 1e-8
    # cos = dot / (max(||s||,eps) * max(||t||,eps)): single EUP rsqrt instead
    # of two sqrt + divide.
    cos = dot * lax.rsqrt(jnp.maximum(ss, eps * eps) * jnp.maximum(tt, eps * eps))
    masked = hm * (1.0 - cos)                         # [nLh, R, 1]
    cos_ref[...] = jnp.sum(masked, axis=1, keepdims=True)      # [nLh, 1, 1]

    # ---- masked attention KL, lane-dense elementwise -----------------------
    # Reference adds 1e-12 to both probabilities before the logs; mask zeros
    # out unselected elements.  Single log per element: t*log(t/s).
    sa = as_ref[...] + 1e-12                          # [L, Ra, 128]
    ta = at_ref[...] + 1e-12
    am = am_ref[...]                                  # [Ra, 128]
    kl_elem = am * (ta * jnp.log(ta / sa))            # [L, Ra, 128]
    lane_sum = jnp.sum(kl_elem, axis=-1, keepdims=True)         # [L, Ra, 1]
    att_ref[...] = jnp.sum(lane_sum, axis=1, keepdims=True)     # [L, 1, 1]

    # ---- logits: softmax-KL (batchmean) + student MLM cross-entropy --------
    s_logits = sl_ref[...]                            # [R, V]
    t_logits = tl_ref[...]
    lab = lab_ref[...]                                # [R, 1] int32
    lm = (lab > -1).astype(jnp.float32)               # [R, 1]  (reference: labels > -1)

    if temperature != 1.0:                            # trace-time specialization
        inv_t = 1.0 / temperature
        s_t = s_logits * inv_t
        t_t = t_logits * inv_t
    else:
        s_t, t_t = s_logits, t_logits

    ls = s_t - jnp.max(s_t, axis=-1, keepdims=True)
    ls = ls - jnp.log(jnp.sum(jnp.exp(ls), axis=-1, keepdims=True))   # log_softmax(s/T)
    lt = t_t - jnp.max(t_t, axis=-1, keepdims=True)
    lt = lt - jnp.log(jnp.sum(jnp.exp(lt), axis=-1, keepdims=True))   # log_softmax(t/T)
    pt = jnp.exp(lt)
    kl_row = jnp.sum(pt * (lt - ls), axis=-1, keepdims=True)          # [R, 1]

    if temperature != 1.0:
        # CE always uses unscaled student logits.
        lsa = s_logits - jnp.max(s_logits, axis=-1, keepdims=True)
        lsa = lsa - jnp.log(jnp.sum(jnp.exp(lsa), axis=-1, keepdims=True))
    else:
        lsa = ls
    # One-hot built in-kernel from an iota-compare (no one-hot DMA).
    onehot = lax.broadcasted_iota(jnp.int32, lsa.shape, 1) == lab      # [R, V]
    nll_row = -jnp.sum(jnp.where(onehot, lsa, 0.0), axis=-1, keepdims=True)

    kl_ref[...] = jnp.sum(lm * kl_row, keepdims=True)                 # (1, 1)
    nll_ref[...] = jnp.sum(lm * nll_row, keepdims=True)               # (1, 1)


# ------------------------------ wrappers -----------------------------------
def _lane_pack(flat, lanes=LANES, sublanes=SUBLANES):
    """Zero-pad the trailing (flattened) axis and fold it to (..., rows, lanes)."""
    n = flat.shape[-1]
    pad = (-n) % (lanes * sublanes)
    if pad:
        flat = jnp.pad(flat, [(0, 0)] * (flat.ndim - 1) + [(0, pad)])
    return flat.reshape(flat.shape[:-1] + (-1, lanes))


def distillation_forward(student_out, teacher_out, attention_mask, labels,
                         temperature=TEMPERATURE):
    """Mirror of DistillationWrapper.forward (loss head only)."""
    s_attentions = student_out["attentions"]
    t_attentions = teacher_out["attentions"]
    s_hidden_states = student_out["hidden_states"]
    t_hidden_states = teacher_out["hidden_states"]
    s_logits = student_out["logits"]
    t_logits = teacher_out["logits"]

    nl_att = len(s_attentions)
    lambdas = [1.0] * nl_att

    b, h, sq, sk = s_attentions[0].shape
    d = s_hidden_states[0].shape[-1]
    v = s_logits.shape[-1]
    r = b * sq
    f32 = jnp.float32

    # --- stack layers so ONE pallas_call covers every loss term -------------
    # Cosine pairs: layer 0 = embedding pair; layer i>=1 = student hidden i vs
    # teacher hidden 2*(i-1)+2  (i.e. t_hiddens[2*idx+1] in the reference).
    s_cos = jnp.stack(s_hidden_states).astype(f32).reshape(-1, r, d)
    t_cos = jnp.stack(
        [t_hidden_states[0]] + [t_hidden_states[2 * i + 2] for i in range(nl_att)]
    ).astype(f32).reshape(-1, r, d)
    nlh = s_cos.shape[0]
    hm = attention_mask.astype(f32).reshape(r, 1)

    # Attention pairs, flattened lane-dense (mask broadcasts over the key axis).
    s_att = jnp.stack(s_attentions).astype(f32).reshape(nl_att, -1)
    t_att = jnp.stack([t_attentions[2 * i + 1] for i in range(nl_att)]
                      ).astype(f32).reshape(nl_att, -1)
    am = jnp.broadcast_to(attention_mask[:, None, :, None].astype(f32),
                          (b, h, sq, sk)).reshape(-1)
    s_att = _lane_pack(s_att)                 # [L, Ra, 128]
    t_att = _lane_pack(t_att)
    am = _lane_pack(am)                       # [Ra, 128]
    ra = s_att.shape[-2]

    s_lg = s_logits.astype(f32).reshape(r, v)
    t_lg = t_logits.astype(f32).reshape(r, v)
    lab = labels.astype(jnp.int32).reshape(r, 1)

    cos_sums, att_sums, kl_sum, nll_sum = pl.pallas_call(
        functools.partial(_distill_kernel, temperature=float(temperature)),
        out_shape=(jax.ShapeDtypeStruct((nlh, 1, 1), f32),
                   jax.ShapeDtypeStruct((nl_att, 1, 1), f32),
                   jax.ShapeDtypeStruct((1, 1), f32),
                   jax.ShapeDtypeStruct((1, 1), f32)),
        grid_spec=pltpu.PrefetchScalarGridSpec(
            num_scalar_prefetch=0,
            grid=(1,),                                   # single-step grid: no init/accum
            in_specs=[pl.BlockSpec((nlh, r, d), lambda i: (0, 0, 0)),
                      pl.BlockSpec((nlh, r, d), lambda i: (0, 0, 0)),
                      pl.BlockSpec((r, 1), lambda i: (0, 0)),
                      pl.BlockSpec((nl_att, ra, LANES), lambda i: (0, 0, 0)),
                      pl.BlockSpec((nl_att, ra, LANES), lambda i: (0, 0, 0)),
                      pl.BlockSpec((ra, LANES), lambda i: (0, 0)),
                      pl.BlockSpec((r, v), lambda i: (0, 0)),
                      pl.BlockSpec((r, v), lambda i: (0, 0)),
                      pl.BlockSpec((r, 1), lambda i: (0, 0))],
            out_specs=(pl.BlockSpec((nlh, 1, 1), lambda i: (0, 0, 0)),
                       pl.BlockSpec((nl_att, 1, 1), lambda i: (0, 0, 0)),
                       pl.BlockSpec((1, 1), lambda i: (0, 0)),
                       pl.BlockSpec((1, 1), lambda i: (0, 0)))),
        compiler_params=pltpu.CompilerParams(
            dimension_semantics=("arbitrary",)),
    )(s_cos, t_cos, hm, s_att, t_att, am, s_lg, t_lg, lab)

    # --- tiny scalar epilogue in plain XLA (counts, lambdas, weights) -------
    n_rows = jnp.sum(attention_mask.astype(f32))        # selected positions / layer
    att_cnt = n_rows * h * sk                           # selected elements / attn layer
    n_lab = jnp.sum((labels > -1).astype(f32))
    safe = lambda c: jnp.maximum(c, 1.0)                # guard cnt==0 -> no NaN

    lam = jnp.asarray(lambdas, dtype=f32)
    embedding_loss = cos_sums[0, 0, 0] / safe(n_rows)   # computed, not in total (as in ref)
    hidden_loss = jnp.sum(lam * cos_sums[1:, 0, 0]) / safe(n_rows)
    att_loss = jnp.sum(lam * att_sums[:, 0, 0]) / safe(att_cnt)
    output_loss = (kl_sum[0, 0] / safe(n_lab)) * (temperature ** 2)   # batchmean
    student_mlm_loss = nll_sum[0, 0] / safe(n_lab)                    # HF MLM CE

    total_loss = (1.0 * student_mlm_loss
                  + 3.0 * (att_loss + hidden_loss)
                  + 5.0 * output_loss)

    return {"loss": total_loss,
            "logits": s_logits,
            "hidden_states": s_hidden_states,
            "attentions": s_attentions,
            "embedding_loss": embedding_loss}


# --------------------------- synthetic inputs ------------------------------
def make_synthetic_outputs(key):
    """Deterministic stand-ins for the student / teacher transformer outputs."""
    ks = iter(jax.random.split(key, 64))

    def attn(k):
        return jax.nn.softmax(jax.random.normal(k, (B, H, S, S), jnp.float32), axis=-1)

    def hid(k):
        return jax.random.normal(k, (B, S, D), jnp.float32)

    student = {
        "attentions": tuple(attn(next(ks)) for _ in range(L_STUDENT)),
        "hidden_states": tuple(hid(next(ks)) for _ in range(L_STUDENT + 1)),
        "logits": jax.random.normal(next(ks), (B, S, V), jnp.float32),
    }
    teacher = {
        "attentions": tuple(attn(next(ks)) for _ in range(L_TEACHER)),
        "hidden_states": tuple(hid(next(ks)) for _ in range(L_TEACHER + 1)),
        "logits": jax.random.normal(next(ks), (B, S, V), jnp.float32),
    }

    attention_mask = jnp.array([[1, 1, 1, 1, 1, 1, 1, 1],
                                [1, 1, 1, 1, 1, 0, 0, 0]], dtype=jnp.int32)
    label_vals = jax.random.randint(next(ks), (B, S), 0, V, dtype=jnp.int32)
    mlm_positions = jnp.array([[1, 0, 0, 1, 0, 0, 1, 0],
                               [0, 1, 0, 0, 1, 0, 0, 0]], dtype=jnp.bool_)
    labels = jnp.where(mlm_positions, label_vals, jnp.int32(-100))
    return student, teacher, attention_mask, labels


if __name__ == "__main__":
    # TODO(synk): the HuggingFace student/teacher transformer forwards themselves are
    # external submodules; their outputs are synthesized here instead of recomputed.
    student_out, teacher_out, attention_mask, labels = make_synthetic_outputs(
        jax.random.PRNGKey(0))

    fwd = jax.jit(distillation_forward)
    out = fwd(student_out, teacher_out, attention_mask, labels)
    jax.block_until_ready(out["loss"])
    assert out["loss"].shape == ()
    assert bool(jnp.isfinite(out["loss"]))
    print("KERNEL_OK")
</pallas_src>

<mosaic_0001>
module attributes {stable_mosaic.version = 11 : i64} {
  func.func @_distill_kernel(%arg0: i32, %arg1: memref<3x16x32xf32, #tpu.memory_space<vmem>>, %arg2: memref<3x16x32xf32, #tpu.memory_space<vmem>>, %arg3: memref<16x1xf32, #tpu.memory_space<vmem>>, %arg4: memref<2x8x128xf32, #tpu.memory_space<vmem>>, %arg5: memref<2x8x128xf32, #tpu.memory_space<vmem>>, %arg6: memref<8x128xf32, #tpu.memory_space<vmem>>, %arg7: memref<16x64xf32, #tpu.memory_space<vmem>>, %arg8: memref<16x64xf32, #tpu.memory_space<vmem>>, %arg9: memref<16x1xi32, #tpu.memory_space<vmem>>, %arg10: memref<3x1x1xf32, #tpu.memory_space<vmem>>, %arg11: memref<2x1x1xf32, #tpu.memory_space<vmem>>, %arg12: memref<1x1xf32, #tpu.memory_space<vmem>>, %arg13: memref<1x1xf32, #tpu.memory_space<vmem>>) attributes {dimension_semantics = [#tpu.dimension_semantics<arbitrary>], iteration_bounds = array<i64: 1>, scalar_prefetch = 0 : i64, scratch_operands = 0 : i64, tpu.core_type = #tpu.core_type<tc>, window_params = [{pipeline_mode = #tpu.pipeline_mode<synchronous>, transform_indices = @transform_0, window_bounds = array<i64: 3, 16, 32>}, {pipeline_mode = #tpu.pipeline_mode<synchronous>, transform_indices = @transform_1, window_bounds = array<i64: 3, 16, 32>}, {pipeline_mode = #tpu.pipeline_mode<synchronous>, transform_indices = @transform_2, window_bounds = array<i64: 16, 1>}, {pipeline_mode = #tpu.pipeline_mode<synchronous>, transform_indices = @transform_3, window_bounds = array<i64: 2, 8, 128>}, {pipeline_mode = #tpu.pipeline_mode<synchronous>, transform_indices = @transform_4, window_bounds = array<i64: 2, 8, 128>}, {pipeline_mode = #tpu.pipeline_mode<synchronous>, transform_indices = @transform_5, window_bounds = array<i64: 8, 128>}, {pipeline_mode = #tpu.pipeline_mode<synchronous>, transform_indices = @transform_6, window_bounds = array<i64: 16, 64>}, {pipeline_mode = #tpu.pipeline_mode<synchronous>, transform_indices = @transform_7, window_bounds = array<i64: 16, 64>}, {pipeline_mode = #tpu.pipeline_mode<synchronous>, transform_indices = @transform_8, window_bounds = array<i64: 16, 1>}, {pipeline_mode = #tpu.pipeline_mode<synchronous>, transform_indices = @transform_9, window_bounds = array<i64: 3, 1, 1>}, {pipeline_mode = #tpu.pipeline_mode<synchronous>, transform_indices = @transform_10, window_bounds = array<i64: 2, 1, 1>}, {pipeline_mode = #tpu.pipeline_mode<synchronous>, transform_indices = @transform_11, window_bounds = array<i64: 1, 1>}, {pipeline_mode = #tpu.pipeline_mode<synchronous>, transform_indices = @transform_12, window_bounds = array<i64: 1, 1>}]} {
    %c0 = arith.constant 0 : index
    %c0_0 = arith.constant 0 : index
    %c0_1 = arith.constant 0 : index
    %0 = vector.load %arg1[%c0, %c0_0, %c0_1] : memref<3x16x32xf32, #tpu.memory_space<vmem>>, vector<3x16x32xf32>
    %c0_2 = arith.constant 0 : index
    %c0_3 = arith.constant 0 : index
    %c0_4 = arith.constant 0 : index
    %1 = vector.load %arg2[%c0_2, %c0_3, %c0_4] : memref<3x16x32xf32, #tpu.memory_space<vmem>>, vector<3x16x32xf32>
    %c0_5 = arith.constant 0 : index
    %c0_6 = arith.constant 0 : index
    %2 = vector.load %arg3[%c0_5, %c0_6] : memref<16x1xf32, #tpu.memory_space<vmem>>, vector<16x1xf32>
    %3 = arith.mulf %0, %1 : vector<3x16x32xf32>
    %cst = arith.constant dense<0.000000e+00> : vector<3x16xf32>
    %4 = vector.multi_reduction <add>, %3, %cst [2] : vector<3x16x32xf32> to vector<3x16xf32>
    %5 = vector.shape_cast %4 : vector<3x16xf32> to vector<3x16x1xf32>
    %6 = arith.mulf %0, %0 : vector<3x16x32xf32>
    %cst_7 = arith.constant dense<0.000000e+00> : vector<3x16xf32>
    %7 = vector.multi_reduction <add>, %6, %cst_7 [2] : vector<3x16x32xf32> to vector<3x16xf32>
    %8 = vector.shape_cast %7 : vector<3x16xf32> to vector<3x16x1xf32>
    %9 = arith.mulf %1, %1 : vector<3x16x32xf32>
    %cst_8 = arith.constant dense<0.000000e+00> : vector<3x16xf32>
    %10 = vector.multi_reduction <add>, %9, %cst_8 [2] : vector<3x16x32xf32> to vector<3x16xf32>
    %11 = vector.shape_cast %10 : vector<3x16xf32> to vector<3x16x1xf32>
    %cst_9 = arith.constant 1.000000e-16 : f32
    %12 = vector.broadcast %cst_9 : f32 to vector<3x16x1xf32>
    %13 = arith.maximumf %8, %12 : vector<3x16x1xf32>
    %cst_10 = arith.constant 1.000000e-16 : f32
    %14 = vector.broadcast %cst_10 : f32 to vector<3x16x1xf32>
    %15 = arith.maximumf %11, %14 : vector<3x16x1xf32>
    %16 = arith.mulf %13, %15 : vector<3x16x1xf32>
    %17 = math.rsqrt %16 : vector<3x16x1xf32>
    %18 = arith.mulf %5, %17 : vector<3x16x1xf32>
    %cst_11 = arith.constant 1.000000e+00 : f32
    %19 = vector.broadcast %cst_11 : f32 to vector<3x16x1xf32>
    %20 = arith.subf %19, %18 : vector<3x16x1xf32>
    %21 = vector.shape_cast %2 : vector<16x1xf32> to vector<1x16x1xf32>
    %22 = vector.broadcast %21 : vector<1x16x1xf32> to vector<3x16x1xf32>
    %23 = arith.mulf %22, %20 : vector<3x16x1xf32>
    %cst_12 = arith.constant dense<0.000000e+00> : vector<3x1xf32>
    %24 = vector.multi_reduction <add>, %23, %cst_12 [1] : vector<3x16x1xf32> to vector<3x1xf32>
    %25 = vector.shape_cast %24 : vector<3x1xf32> to vector<3x1x1xf32>
    %c0_13 = arith.constant 0 : index
    %c0_14 = arith.constant 0 : index
    %c0_15 = arith.constant 0 : index
    %26 = vector.load %arg10[%c0_13, %c0_14, %c0_15] : memref<3x1x1xf32, #tpu.memory_space<vmem>>, vector<3x1x1xf32>
    tpu.vector_store %arg10[%c0_13, %c0_14, %c0_15], %25 {strides = array<i32>} : memref<3x1x1xf32, #tpu.memory_space<vmem>>, vector<3x1x1xf32>,
    %c0_16 = arith.constant 0 : index
    %c0_17 = arith.constant 0 : index
    %c0_18 = arith.constant 0 : index
    %27 = vector.load %arg4[%c0_16, %c0_17, %c0_18] : memref<2x8x128xf32, #tpu.memory_space<vmem>>, vector<2x8x128xf32>
    %cst_19 = arith.constant 9.99999996E-13 : f32
    %28 = vector.broadcast %cst_19 : f32 to vector<2x8x128xf32>
    %29 = arith.addf %27, %28 : vector<2x8x128xf32>
    %c0_20 = arith.constant 0 : index
    %c0_21 = arith.constant 0 : index
    %c0_22 = arith.constant 0 : index
    %30 = vector.load %arg5[%c0_20, %c0_21, %c0_22] : memref<2x8x128xf32, #tpu.memory_space<vmem>>, vector<2x8x128xf32>
    %cst_23 = arith.constant 9.99999996E-13 : f32
    %31 = vector.broadcast %cst_23 : f32 to vector<2x8x128xf32>
    %32 = arith.addf %30, %31 : vector<2x8x128xf32>
    %c0_24 = arith.constant 0 : index
    %c0_25 = arith.constant 0 : index
    %33 = vector.load %arg6[%c0_24, %c0_25] : memref<8x128xf32, #tpu.memory_space<vmem>>, vector<8x128xf32>
    %34 = arith.divf %32, %29 : vector<2x8x128xf32>
    %35 = math.log %34 : vector<2x8x128xf32>
    %36 = arith.mulf %32, %35 : vector<2x8x128xf32>
    %37 = vector.shape_cast %33 : vector<8x128xf32> to vector<1x8x128xf32>
    %38 = vector.broadcast %37 : vector<1x8x128xf32> to vector<2x8x128xf32>
    %39 = arith.mulf %38, %36 : vector<2x8x128xf32>
    %cst_26 = arith.constant dense<0.000000e+00> : vector<2x8xf32>
    %40 = vector.multi_reduction <add>, %39, %cst_26 [2] : vector<2x8x128xf32> to vector<2x8xf32>
    %41 = vector.shape_cast %40 : vector<2x8xf32> to vector<2x8x1xf32>
    %cst_27 = arith.constant dense<0.000000e+00> : vector<2x1xf32>
    %42 = vector.multi_reduction <add>, %41, %cst_27 [1] : vector<2x8x1xf32> to vector<2x1xf32>
    %43 = vector.shape_cast %42 : vector<2x1xf32> to vector<2x1x1xf32>
    %c0_28 = arith.constant 0 : index
    %c0_29 = arith.constant 0 : index
    %c0_30 = arith.constant 0 : index
    %44 = vector.load %arg11[%c0_28, %c0_29, %c0_30] : memref<2x1x1xf32, #tpu.memory_space<vmem>>, vector<2x1x1xf32>
    tpu.vector_store %arg11[%c0_28, %c0_29, %c0_30], %43 {strides = array<i32>} : memref<2x1x1xf32, #tpu.memory_space<vmem>>, vector<2x1x1xf32>,
    %c0_31 = arith.constant 0 : index
    %c0_32 = arith.constant 0 : index
    %45 = vector.load %arg7[%c0_31, %c0_32] : memref<16x64xf32, #tpu.memory_space<vmem>>, vector<16x64xf32>
    %c0_33 = arith.constant 0 : index
    %c0_34 = arith.constant 0 : index
    %46 = vector.load %arg8[%c0_33, %c0_34] : memref<16x64xf32, #tpu.memory_space<vmem>>, vector<16x64xf32>
    %c0_35 = arith.constant 0 : index
    %c0_36 = arith.constant 0 : index
    %47 = vector.load %arg9[%c0_35, %c0_36] : memref<16x1xi32, #tpu.memory_space<vmem>>, vector<16x1xi32>
    %c-1_i32 = arith.constant -1 : i32
    %48 = vector.broadcast %c-1_i32 : i32 to vector<16x1xi32>
    %49 = arith.cmpi sgt, %47, %48 : vector<16x1xi32>
    %50 = arith.extui %49 : vector<16x1xi1> to vector<16x1xi32>
    %51 = arith.sitofp %50 : vector<16x1xi32> to vector<16x1xf32>
    %cst_37 = arith.constant dense<0xFF800000> : vector<16xf32>
    %52 = vector.multi_reduction <maximumf>, %45, %cst_37 [1] : vector<16x64xf32> to vector<16xf32>
    %53 = vector.shape_cast %52 : vector<16xf32> to vector<16x1xf32>
    %54 = vector.broadcast %53 : vector<16x1xf32> to vector<16x64xf32>
    %55 = arith.subf %45, %54 : vector<16x64xf32>
    %56 = math.exp %55 : vector<16x64xf32>
    %cst_38 = arith.constant dense<0.000000e+00> : vector<16xf32>
    %57 = vector.multi_reduction <add>, %56, %cst_38 [1] : vector<16x64xf32> to vector<16xf32>
    %58 = vector.shape_cast %57 : vector<16xf32> to vector<16x1xf32>
    %59 = math.log %58 : vector<16x1xf32>
    %60 = vector.broadcast %59 : vector<16x1xf32> to vector<16x64xf32>
    %61 = arith.subf %55, %60 : vector<16x64xf32>
    %cst_39 = arith.constant dense<0xFF800000> : vector<16xf32>
    %62 = vector.multi_reduction <maximumf>, %46, %cst_39 [1] : vector<16x64xf32> to vector<16xf32>
    %63 = vector.shape_cast %62 : vector<16xf32> to vector<16x1xf32>
    %64 = vector.broadcast %63 : vector<16x1xf32> to vector<16x64xf32>
    %65 = arith.subf %46, %64 : vector<16x64xf32>
    %66 = math.exp %65 : vector<16x64xf32>
    %cst_40 = arith.constant dense<0.000000e+00> : vector<16xf32>
    %67 = vector.multi_reduction <add>, %66, %cst_40 [1] : vector<16x64xf32> to vector<16xf32>
    %68 = vector.shape_cast %67 : vector<16xf32> to vector<16x1xf32>
    %69 = math.log %68 : vector<16x1xf32>
    %70 = vector.broadcast %69 : vector<16x1xf32> to vector<16x64xf32>
    %71 = arith.subf %65, %70 : vector<16x64xf32>
    %72 = math.exp %71 : vector<16x64xf32>
    %73 = arith.subf %71, %61 : vector<16x64xf32>
    %74 = arith.mulf %72, %73 : vector<16x64xf32>
    %cst_41 = arith.constant dense<0.000000e+00> : vector<16xf32>
    %75 = vector.multi_reduction <add>, %74, %cst_41 [1] : vector<16x64xf32> to vector<16xf32>
    %76 = vector.shape_cast %75 : vector<16xf32> to vector<16x1xf32>
    %77 = tpu.iota {dimensions = array<i32: 1>} : vector<16x64xi32>
    %78 = vector.broadcast %47 : vector<16x1xi32> to vector<16x64xi32>
    %79 = arith.cmpi eq, %77, %78 : vector<16x64xi32>
    %cst_42 = arith.constant 0.000000e+00 : f32
    %80 = vector.broadcast %cst_42 : f32 to vector<16x64xf32>
    %81 = arith.select %79, %61, %80 : vector<16x64xi1>, vector<16x64xf32>
    %cst_43 = arith.constant dense<0.000000e+00> : vector<16xf32>
    %82 = vector.multi_reduction <add>, %81, %cst_43 [1] : vector<16x64xf32> to vector<16xf32>
    %83 = vector.shape_cast %82 : vector<16xf32> to vector<16x1xf32>
    %cst_44 = arith.constant 0.000000e+00 : f32
    %84 = vector.broadcast %cst_44 : f32 to vector<16x1xf32>
    %85 = arith.subf %84, %83 : vector<16x1xf32>
    %86 = arith.mulf %51, %76 : vector<16x1xf32>
    %87 = vector.shape_cast %86 : vector<16x1xf32> to vector<1x16x1xf32>
    %cst_45 = arith.constant dense<0.000000e+00> : vector<1xf32>
    %88 = vector.multi_reduction <add>, %87, %cst_45 [1, 2] : vector<1x16x1xf32> to vector<1xf32>
    %89 = vector.shape_cast %88 : vector<1xf32> to vector<1x1x1xf32>
    %90 = vector.extract %89[0, 0, 0] : f32 from vector<1x1x1xf32>
    %91 = vector.broadcast %90 : f32 to vector<1x1xf32>
    %c0_46 = arith.constant 0 : index
    %c0_47 = arith.constant 0 : index
    %92 = vector.load %arg12[%c0_46, %c0_47] : memref<1x1xf32, #tpu.memory_space<vmem>>, vector<1x1xf32>
    tpu.vector_store %arg12[%c0_46, %c0_47], %91 {strides = array<i32>} : memref<1x1xf32, #tpu.memory_space<vmem>>, vector<1x1xf32>,
    %93 = arith.mulf %51, %85 : vector<16x1xf32>
    %94 = vector.shape_cast %93 : vector<16x1xf32> to vector<1x16x1xf32>
    %cst_48 = arith.constant dense<0.000000e+00> : vector<1xf32>
    %95 = vector.multi_reduction <add>, %94, %cst_48 [1, 2] : vector<1x16x1xf32> to vector<1xf32>
    %96 = vector.shape_cast %95 : vector<1xf32> to vector<1x1x1xf32>
    %97 = vector.extract %96[0, 0, 0] : f32 from vector<1x1x1xf32>
    %98 = vector.broadcast %97 : f32 to vector<1x1xf32>
    %c0_49 = arith.constant 0 : index
    %c0_50 = arith.constant 0 : index
    %99 = vector.load %arg13[%c0_49, %c0_50] : memref<1x1xf32, #tpu.memory_space<vmem>>, vector<1x1xf32>
    tpu.vector_store %arg13[%c0_49, %c0_50], %98 {strides = array<i32>} : memref<1x1xf32, #tpu.memory_space<vmem>>, vector<1x1xf32>,
    return
  }
  func.func @transform_0(%arg0: i32) -> (i32, i32, i32) {
    %c0_i32 = arith.constant 0 : i32
    %c0_i32_0 = arith.constant 0 : i32
    %c0_i32_1 = arith.constant 0 : i32
    %c0_i32_2 = arith.constant 0 : i32
    return %c0_i32, %c0_i32_0, %c0_i32_1 : i32, i32, i32
  }
  func.func @transform_1(%arg0: i32) -> (i32, i32, i32) {
    %c0_i32 = arith.constant 0 : i32
    %c0_i32_0 = arith.constant 0 : i32
    %c0_i32_1 = arith.constant 0 : i32
    %c0_i32_2 = arith.constant 0 : i32
    return %c0_i32, %c0_i32_0, %c0_i32_1 : i32, i32, i32
  }
  func.func @transform_2(%arg0: i32) -> (i32, i32) {
    %c0_i32 = arith.constant 0 : i32
    %c0_i32_0 = arith.constant 0 : i32
    %c0_i32_1 = arith.constant 0 : i32
    return %c0_i32, %c0_i32_0 : i32, i32
  }
  func.func @transform_3(%arg0: i32) -> (i32, i32, i32) {
    %c0_i32 = arith.constant 0 : i32
    %c0_i32_0 = arith.constant 0 : i32
    %c0_i32_1 = arith.constant 0 : i32
    %c0_i32_2 = arith.constant 0 : i32
    return %c0_i32, %c0_i32_0, %c0_i32_1 : i32, i32, i32
  }
  func.func @transform_4(%arg0: i32) -> (i32, i32, i32) {
    %c0_i32 = arith.constant 0 : i32
    %c0_i32_0 = arith.constant 0 : i32
    %c0_i32_1 = arith.constant 0 : i32
    %c0_i32_2 = arith.constant 0 : i32
    return %c0_i32, %c0_i32_0, %c0_i32_1 : i32, i32, i32
  }
  func.func @transform_5(%arg0: i32) -> (i32, i32) {
    %c0_i32 = arith.constant 0 : i32
    %c0_i32_0 = arith.constant 0 : i32
    %c0_i32_1 = arith.constant 0 : i32
    return %c0_i32, %c0_i32_0 : i32, i32
  }
  func.func @transform_6(%arg0: i32) -> (i32, i32) {
    %c0_i32 = arith.constant 0 : i32
    %c0_i32_0 = arith.constant 0 : i32
    %c0_i32_1 = arith.constant 0 : i32
    return %c0_i32, %c0_i32_0 : i32, i32
  }
  func.func @transform_7(%arg0: i32) -> (i32, i32) {
    %c0_i32 = arith.constant 0 : i32
    %c0_i32_0 = arith.constant 0 : i32
    %c0_i32_1 = arith.constant 0 : i32
    return %c0_i32, %c0_i32_0 : i32, i32
  }
  func.func @transform_8(%arg0: i32) -> (i32, i32) {
    %c0_i32 = arith.constant 0 : i32
    %c0_i32_0 = arith.constant 0 : i32
    %c0_i32_1 = arith.constant 0 : i32
    return %c0_i32, %c0_i32_0 : i32, i32
  }
  func.func @transform_9(%arg0: i32) -> (i32, i32, i32) {
    %c0_i32 = arith.constant 0 : i32
    %c0_i32_0 = arith.constant 0 : i32
    %c0_i32_1 = arith.constant 0 : i32
    %c0_i32_2 = arith.constant 0 : i32
    return %c0_i32, %c0_i32_0, %c0_i32_1 : i32, i32, i32
  }
  func.func @transform_10(%arg0: i32) -> (i32, i32, i32) {
    %c0_i32 = arith.constant 0 : i32
    %c0_i32_0 = arith.constant 0 : i32
    %c0_i32_1 = arith.constant 0 : i32
    %c0_i32_2 = arith.constant 0 : i32
    return %c0_i32, %c0_i32_0, %c0_i32_1 : i32, i32, i32
  }
  func.func @transform_11(%arg0: i32) -> (i32, i32) {
    %c0_i32 = arith.constant 0 : i32
    %c0_i32_0 = arith.constant 0 : i32
    %c0_i32_1 = arith.constant 0 : i32
    return %c0_i32, %c0_i32_0 : i32, i32
  }
  func.func @transform_12(%arg0: i32) -> (i32, i32) {
    %c0_i32 = arith.constant 0 : i32
    %c0_i32_0 = arith.constant 0 : i32
    %c0_i32_1 = arith.constant 0 : i32
    return %c0_i32, %c0_i32_0 : i32, i32
  }
}

</mosaic_0001>

<llo_original>
// kernel: distillation_forward.1
$region0: #{distillation_forward.1}
  #allocation0 [shape = 'u32[]', space=smem, size = 0x4, offset = 0x4, fixed_abs, tag = 'smem constant byte address 0x4 - core index']
  #allocation1 [shape = 'u32[144,128]{1,0:T(1,128)}', space=vmem, size = 0x12000, scoped, tag = 'internal scratch']
  %s0 = inlined_call_operand.vmem [shape: f32[3,16,32], index: 0, kind: input, shape index: {}]
  %s1 = inlined_call_operand.vmem [shape: f32[3,16,32], index: 1, kind: input, shape index: {}]
  %s2 = inlined_call_operand.vmem [shape: f32[16,1], index: 2, kind: input, shape index: {}]
  %s3 = inlined_call_operand.vmem [shape: f32[2,8,128], index: 3, kind: input, shape index: {}]
  %s4 = inlined_call_operand.vmem [shape: f32[2,8,128], index: 4, kind: input, shape index: {}]
  %s5 = inlined_call_operand.vmem [shape: f32[8,128], index: 5, kind: input, shape index: {}]
  %s6 = inlined_call_operand.vmem [shape: f32[16,64], index: 6, kind: input, shape index: {}]
  %s7 = inlined_call_operand.vmem [shape: f32[16,64], index: 7, kind: input, shape index: {}]
  %s8 = inlined_call_operand.vmem [shape: s32[16,1], index: 8, kind: input, shape index: {}]
  %s9 = inlined_call_operand.vmem [shape: f32[3,1,1], index: 9, kind: output, shape index: {0}]
  %s10 = inlined_call_operand.vmem [shape: f32[2,1,1], index: 10, kind: output, shape index: {1}]
  %s11 = inlined_call_operand.hbm [shape: f32[1,1], index: 11, kind: output, shape index: {2}]
  %s12 = inlined_call_operand.hbm [shape: f32[1,1], index: 12, kind: output, shape index: {3}]
  %13 = xla_tuple %s9, %s10, %s11, %s12
  %s14 = sld [smem:[#allocation0]]
  $region70: #{distillation_forward.1} parent=0
    _
  %s16 = ssub.s32 1, %s14
  %s17 = scalar_select 0, %s16, %s14
  $region1: #{distillation_forward.1} parent=0
    #allocation2 [shape = 'u8[512]{0}', space=vmem, size = 0x400, scoped, tag = 'output window, operand 2, single buffered']
    #allocation3 [shape = 's32[1]{0}', space=sflag, size = 0x4, scoped, tag = 'scoped memory for distillation_forward.1']
    #allocation4 [shape = 'u8[512]{0}', space=vmem, size = 0x400, scoped, tag = 'output window, operand 3, single buffered']
    #allocation5 [shape = 's32[1]{0}', space=sflag, size = 0x4, scoped, tag = 'scoped memory for distillation_forward.1']
    %18 = vsyncpa [#allocation3], 0
    %19 = vsyncpa [#allocation5], 0
    // Predicated region
    $region2: #{distillation_forward.1} parent=1 // pred_check
      _
    $region3: #{distillation_forward.1} parent=1 // pred_check_branch
      %21 = sbr.rel (0) target = $region5
    $region4: #{distillation_forward.1} parent=1 // pred_region
      _
    $region5: #{distillation_forward.1} parent=1 // pred_fallthru
      _
    // Predicated region
    $region6: #{distillation_forward.1} parent=1 // pred_check
      _
    $region7: #{distillation_forward.1} parent=1 // pred_check_branch
      %23 = sbr.rel (0) target = $region9
    $region8: #{distillation_forward.1} parent=1 // pred_region
      _
    $region9: #{distillation_forward.1} parent=1 // pred_fallthru
      _
    // Predicated region
    $region10: #{distillation_forward.1} parent=1 // pred_check
      _
    $region11: #{distillation_forward.1} parent=1 // pred_check_branch
      %25 = sbr.rel (0) target = $region13
    $region12: #{distillation_forward.1} parent=1 // pred_region
      _
    $region13: #{distillation_forward.1} parent=1 // pred_fallthru
      _
    // Predicated region
    $region14: #{distillation_forward.1} parent=1 // pred_check
      _
    $region15: #{distillation_forward.1} parent=1 // pred_check_branch
      %27 = sbr.rel (0) target = $region17
    $region16: #{distillation_forward.1} parent=1 // pred_region
      _
    $region17: #{distillation_forward.1} parent=1 // pred_fallthru
      _
    // Predicated region
    $region18: #{distillation_forward.1} parent=1 // pred_check
      _
    $region19: #{distillation_forward.1} parent=1 // pred_check_branch
      %29 = sbr.rel (0) target = $region21
    $region20: #{distillation_forward.1} parent=1 // pred_region
      _
    $region21: #{distillation_forward.1} parent=1 // pred_fallthru
      _
    // Predicated region
    $region22: #{distillation_forward.1} parent=1 // pred_check
      _
    $region23: #{distillation_forward.1} parent=1 // pred_check_branch
      %31 = sbr.rel (0) target = $region25
    $region24: #{distillation_forward.1} parent=1 // pred_region
      _
    $region25: #{distillation_forward.1} parent=1 // pred_fallthru
      _
    // Predicated region
    $region26: #{distillation_forward.1} parent=1 // pred_check
      _
    $region27: #{distillation_forward.1} parent=1 // pred_check_branch
      %33 = sbr.rel (0) target = $region29
    $region28: #{distillation_forward.1} parent=1 // pred_region
      _
    $region29: #{distillation_forward.1} parent=1 // pred_fallthru
      _
    // Predicated region
    $region30: #{distillation_forward.1} parent=1 // pred_check
      _
    $region31: #{distillation_forward.1} parent=1 // pred_check_branch
      %35 = sbr.rel (0) target = $region33
    $region32: #{distillation_forward.1} parent=1 // pred_region
      _
    $region33: #{distillation_forward.1} parent=1 // pred_fallthru
      _
    // Predicated region
    $region34: #{distillation_forward.1} parent=1 // pred_check
      _
    $region35: #{distillation_forward.1} parent=1 // pred_check_branch
      %37 = sbr.rel (0) target = $region37
    $region36: #{distillation_forward.1} parent=1 // pred_region
      _
    $region37: #{distillation_forward.1} parent=1 // pred_fallthru
      _
    %v38 = vld [vmem:[%s0] sm:$0xff]
    %v39 = vld [vmem:[%s0 + $0x8] sm:$0xff]
    %v40 = vld [vmem:[%s0 + $0x10] sm:$0xff]
    %v41 = vld [vmem:[%s0 + $0x18] sm:$0xff]
    %v42 = vld [vmem:[%s0 + $0x20] sm:$0xff]
    %v43 = vld [vmem:[%s0 + $0x28] sm:$0xff]
    %v44 = vld [vmem:[%s1] sm:$0xff]
    %v45 = vld [vmem:[%s1 + $0x8] sm:$0xff]
    %v46 = vld [vmem:[%s1 + $0x10] sm:$0xff]
    %v47 = vld [vmem:[%s1 + $0x18] sm:$0xff]
    %v48 = vld [vmem:[%s1 + $0x20] sm:$0xff]
    %v49 = vld [vmem:[%s1 + $0x28] sm:$0xff]
    %v50 = vld [vmem:[%s2] sm:$0xff]
    %v51 = vld [vmem:[%s2 + $0x8] sm:$0xff]
    %v52 = vmul.f32 %v38, %v44
    %v53 = vmul.f32 %v39, %v45
    %v54 = vmul.f32 %v40, %v46
    %v55 = vmul.f32 %v41, %v47
    %v56 = vmul.f32 %v42, %v48
    %v57 = vmul.f32 %v43, %v49
    %vm58 = vcmask 261120
    %v59 = vsel %vm58, %v52, 0.0
    %60 = vadd.xlane.f32.xlu0 %v59
    %v61 = vpop.xlane.xlu0 %60
    %v62 = vsel %vm58, %v53, 0.0
    %63 = vadd.xlane.f32.xlu0 %v62
    %v64 = vpop.xlane.xlu0 %63
    %v65 = vsel %vm58, %v54, 0.0
    %66 = vadd.xlane.f32.xlu0 %v65
    %v67 = vpop.xlane.xlu0 %66
    %v68 = vsel %vm58, %v55, 0.0
    %69 = vadd.xlane.f32.xlu0 %v68
    %v70 = vpop.xlane.xlu0 %69
    %v71 = vsel %vm58, %v56, 0.0
    %72 = vadd.xlane.f32.xlu0 %v71
    %v73 = vpop.xlane.xlu0 %72
    %v74 = vsel %vm58, %v57, 0.0
    %75 = vadd.xlane.f32.xlu0 %v74
    %v76 = vpop.xlane.xlu0 %75
    %v77 = vmul.f32 %v38, %v38
    %v78 = vmul.f32 %v39, %v39
    %v79 = vmul.f32 %v40, %v40
    %v80 = vmul.f32 %v41, %v41
    %v81 = vmul.f32 %v42, %v42
    %v82 = vmul.f32 %v43, %v43
    %v83 = vsel %vm58, %v77, 0.0
    %84 = vadd.xlane.f32.xlu0 %v83
    %v85 = vpop.xlane.xlu0 %84
    %v86 = vsel %vm58, %v78, 0.0
    %87 = vadd.xlane.f32.xlu0 %v86
    %v88 = vpop.xlane.xlu0 %87
    %v89 = vsel %vm58, %v79, 0.0
    %90 = vadd.xlane.f32.xlu0 %v89
    %v91 = vpop.xlane.xlu0 %90
    %v92 = vsel %vm58, %v80, 0.0
    %93 = vadd.xlane.f32.xlu0 %v92
    %v94 = vpop.xlane.xlu0 %93
    %v95 = vsel %vm58, %v81, 0.0
    %96 = vadd.xlane.f32.xlu0 %v95
    %v97 = vpop.xlane.xlu0 %96
    %v98 = vsel %vm58, %v82, 0.0
    %99 = vadd.xlane.f32.xlu0 %v98
    %v100 = vpop.xlane.xlu0 %99
    %v101 = vmul.f32 %v44, %v44
    %v102 = vmul.f32 %v45, %v45
    %v103 = vmul.f32 %v46, %v46
    %v104 = vmul.f32 %v47, %v47
    %v105 = vmul.f32 %v48, %v48
    %v106 = vmul.f32 %v49, %v49
    %v107 = vsel %vm58, %v101, 0.0
    %108 = vadd.xlane.f32.xlu0 %v107
    %v109 = vpop.xlane.xlu0 %108
    %v110 = vsel %vm58, %v102, 0.0
    %111 = vadd.xlane.f32.xlu0 %v110
    %v112 = vpop.xlane.xlu0 %111
    %v113 = vsel %vm58, %v103, 0.0
    %114 = vadd.xlane.f32.xlu0 %v113
    %v115 = vpop.xlane.xlu0 %114
    %v116 = vsel %vm58, %v104, 0.0
    %117 = vadd.xlane.f32.xlu0 %v116
    %v118 = vpop.xlane.xlu0 %117
    %v119 = vsel %vm58, %v105, 0.0
    %120 = vadd.xlane.f32.xlu0 %v119
    %v121 = vpop.xlane.xlu0 %120
    %v122 = vsel %vm58, %v106, 0.0
    %123 = vadd.xlane.f32.xlu0 %v122
    %v124 = vpop.xlane.xlu0 %123
    %v125 = vmax.f32 %v85, 1e-16
    %v126 = vmax.f32 %v88, 1e-16
    %v127 = vmax.f32 %v91, 1e-16
    %v128 = vmax.f32 %v94, 1e-16
    %v129 = vmax.f32 %v97, 1e-16
    %v130 = vmax.f32 %v100, 1e-16
    %v131 = vmax.f32 %v109, 1e-16
    %v132 = vmax.f32 %v112, 1e-16
    %v133 = vmax.f32 %v115, 1e-16
    %v134 = vmax.f32 %v118, 1e-16
    %v135 = vmax.f32 %v121, 1e-16
    %v136 = vmax.f32 %v124, 1e-16
    %v137 = vmul.f32 %v125, %v131
    %v138 = vmul.f32 %v126, %v132
    %v139 = vmul.f32 %v127, %v133
    %v140 = vmul.f32 %v128, %v134
    %v141 = vmul.f32 %v129, %v135
    %v142 = vmul.f32 %v130, %v136
    %v143 = vrsqrt.pop %v137
    %v144 = vrsqrt.pop %v138
    %v145 = vrsqrt.pop %v139
    %v146 = vrsqrt.pop %v140
    %v147 = vrsqrt.pop %v141
    %v148 = vrsqrt.pop %v142
    %v149 = vmul.f32 %v61, %v143
    %v150 = vmul.f32 %v64, %v144
    %v151 = vmul.f32 %v67, %v145
    %v152 = vmul.f32 %v70, %v146
    %v153 = vmul.f32 %v73, %v147
    %v154 = vmul.f32 %v76, %v148
    %v155 = vsub.f32 1.0, %v149
    %v156 = vsub.f32 1.0, %v150
    %v157 = vsub.f32 1.0, %v151
    %v158 = vsub.f32 1.0, %v152
    %v159 = vsub.f32 1.0, %v153
    %v160 = vsub.f32 1.0, %v154
    %v161 = vmul.f32 %v50, %v155
    %v162 = vmul.f32 %v51, %v156
    %v163 = vmul.f32 %v50, %v157
    %v164 = vmul.f32 %v51, %v158
    %v165 = vmul.f32 %v50, %v159
    %v166 = vmul.f32 %v51, %v160
    %vm167 = vcmask 7168
    %v168 = vsel %vm167, %v161, 0.0
    %v169 = vsel %vm167, %v162, 0.0
    %v170 = vadd.f32 %v168, %v169
    %v171 = vrot.slane %v170, 4
    %v172 = vadd.f32 %v170, %v171
    %v173 = vrot.slane %v172, 2
    %v174 = vadd.f32 %v172, %v173
    %v175 = vrot.slane %v174, 1
    %v176 = vadd.f32 %v174, %v175
    %v177 = vsel %vm167, %v163, 0.0
    %v178 = vsel %vm167, %v164, 0.0
    %v179 = vadd.f32 %v177, %v178
    %v180 = vrot.slane %v179, 4
    %v181 = vadd.f32 %v179, %v180
    %v182 = vrot.slane %v181, 2
    %v183 = vadd.f32 %v181, %v182
    %v184 = vrot.slane %v183, 1
    %v185 = vadd.f32 %v183, %v184
    %v186 = vsel %vm167, %v165, 0.0
    %v187 = vsel %vm167, %v166, 0.0
    %v188 = vadd.f32 %v186, %v187
    %v189 = vrot.slane %v188, 4
    %v190 = vadd.f32 %v188, %v189
    %v191 = vrot.slane %v190, 2
    %v192 = vadd.f32 %v190, %v191
    %v193 = vrot.slane %v192, 1
    %v194 = vadd.f32 %v192, %v193
    %vm195 = vcmask 0
    %196 = vst.msk [vmem:[%s9] sm:$0x1] %vm195, %v176
    %197 = vst.msk [vmem:[%s9 + $0x1] sm:$0x1] %vm195, %v185
    %198 = vst.msk [vmem:[%s9 + $0x2] sm:$0x1] %vm195, %v194
    %v199 = vld [vmem:[%s3] sm:$0xff]
    %v200 = vld [vmem:[%s3 + $0x8] sm:$0xff]
    %v201 = vadd.f32 %v199, 1e-12
    %v202 = vadd.f32 %v200, 1e-12
    %v203 = vld [vmem:[%s4] sm:$0xff]
    %v204 = vld [vmem:[%s4 + $0x8] sm:$0xff]
    %v205 = vadd.f32 %v203, 1e-12
    %v206 = vadd.f32 %v204, 1e-12
    %v207 = vld [vmem:[%s5] sm:$0xff]
    %v208 = vrcp.pop %v201
    %v209 = vmul.f32 %v205, %v208
    %v210 = vrcp.pop %v202
    %v211 = vmul.f32 %v206, %v210
    %v212 = vlog2.pop %v209
    %v213 = vmul.f32 %v212, 0.6931472
    %v214 = vlog2.pop %v211
    %v215 = vmul.f32 %v214, 0.6931472
    %v216 = vmul.f32 %v205, %v213
    %v217 = vmul.f32 %v206, %v215
    %v218 = vmul.f32 %v207, %v216
    %v219 = vmul.f32 %v207, %v217
    %220 = vadd.xlane.f32.xlu0 %v218
    %v221 = vpop.xlane.xlu0 %220
    %222 = vadd.xlane.f32.xlu0 %v219
    %v223 = vpop.xlane.xlu0 %222
    %v224 = vrot.slane %v221, 4
    %v225 = vadd.f32 %v221, %v224
    %v226 = vrot.slane %v225, 2
    %v227 = vadd.f32 %v225, %v226
    %v228 = vrot.slane %v227, 1
    %v229 = vadd.f32 %v227, %v228
    %v230 = vrot.slane %v223, 4
    %v231 = vadd.f32 %v223, %v230
    %v232 = vrot.slane %v231, 2
    %v233 = vadd.f32 %v231, %v232
    %v234 = vrot.slane %v233, 1
    %v235 = vadd.f32 %v233, %v234
    %236 = vst.msk [vmem:[%s10] sm:$0x1] %vm195, %v229
    %237 = vst.msk [vmem:[%s10 + $0x1] sm:$0x1] %vm195, %v235
    %v238 = vld [vmem:[%s6] sm:$0xff]
    %v239 = vld [vmem:[%s6 + $0x8] sm:$0xff]
    %v240 = vld [vmem:[%s7] sm:$0xff]
    %v241 = vld [vmem:[%s7 + $0x8] sm:$0xff]
    %v242 = vld [vmem:[%s8] sm:$0xff]
    %v243 = vld [vmem:[%s8 + $0x8] sm:$0xff]
    %vm244 = vcmp.gt.s32.totalorder %v242, 4294967295
    %vm245 = vcmp.gt.s32.totalorder %v243, 4294967295
    %v246 = vsel %vm244, 1, 0
    %v247 = vsel %vm245, 1, 0
    %v248 = vcvt.s32.f32 %v246
    %v249 = vcvt.s32.f32 %v247
    %vm250 = vcmask 523264
    %v251 = vsel %vm250, %v238, -inf
    %252 = vmax.xlane.f32.xlu0 %v251
    %v253 = vpop.xlane.xlu0 %252
    %v254 = vsel %vm250, %v239, -inf
    %255 = vmax.xlane.f32.xlu0 %v254
    %v256 = vpop.xlane.xlu0 %255
    %v257 = vsub.f32 %v238, %v253
    %v258 = vsub.f32 %v239, %v256
    %v259 = vmul.f32 %v257, 1.442695
    %v260 = vpow.pop %v259
    %v261 = vmul.f32 %v258, 1.442695
    %v262 = vpow.pop %v261
    %v263 = vsel %vm250, %v260, 0.0
    %264 = vadd.xlane.f32.xlu0 %v263
    %v265 = vpop.xlane.xlu0 %264
    %v266 = vsel %vm250, %v262, 0.0
    %267 = vadd.xlane.f32.xlu0 %v266
    %v268 = vpop.xlane.xlu0 %267
    %v269 = vlog2.pop %v265
    %v270 = vmul.f32 %v269, 0.6931472
    %v271 = vlog2.pop %v268
    %v272 = vmul.f32 %v271, 0.6931472
    %v273 = vsub.f32 %v257, %v270
    %v274 = vsub.f32 %v258, %v272
    %v275 = vsel %vm250, %v240, -inf
    %276 = vmax.xlane.f32.xlu0 %v275
    %v277 = vpop.xlane.xlu0 %276
    %v278 = vsel %vm250, %v241, -inf
    %279 = vmax.xlane.f32.xlu0 %v278
    %v280 = vpop.xlane.xlu0 %279
    %v281 = vsub.f32 %v240, %v277
    %v282 = vsub.f32 %v241, %v280
    %v283 = vmul.f32 %v281, 1.442695
    %v284 = vpow.pop %v283
    %v285 = vmul.f32 %v282, 1.442695
    %v286 = vpow.pop %v285
    %v287 = vsel %vm250, %v284, 0.0
    %288 = vadd.xlane.f32.xlu0 %v287
    %v289 = vpop.xlane.xlu0 %288
    %v290 = vsel %vm250, %v286, 0.0
    %291 = vadd.xlane.f32.xlu0 %v290
    %v292 = vpop.xlane.xlu0 %291
    %v293 = vlog2.pop %v289
    %v294 = vmul.f32 %v293, 0.6931472
    %v295 = vlog2.pop %v292
    %v296 = vmul.f32 %v295, 0.6931472
    %v297 = vsub.f32 %v281, %v294
    %v298 = vsub.f32 %v282, %v296
    %v299 = vmul.f32 %v297, 1.442695
    %v300 = vpow.pop %v299
    %v301 = vmul.f32 %v298, 1.442695
    %v302 = vpow.pop %v301
    %v303 = vsub.f32 %v297, %v273
    %v304 = vsub.f32 %v298, %v274
    %v305 = vmul.f32 %v300, %v303
    %v306 = vmul.f32 %v302, %v304
    %v307 = vsel %vm250, %v305, 0.0
    %308 = vadd.xlane.f32.xlu0 %v307
    %v309 = vpop.xlane.xlu0 %308
    %v310 = vsel %vm250, %v306, 0.0
    %311 = vadd.xlane.f32.xlu0 %v310
    %v312 = vpop.xlane.xlu0 %311
    %v313 = vlaneseq
    %v314 = vand.u32 %v313, 127
    %315 = vset.pattern.permute.xlu0 0
    %316 = vperm.xlu0 %315, %v242
    %v317 = vpop.permute.xlu0 %316
    %318 = vset.pattern.permute.xlu0 0
    %319 = vperm.xlu0 %318, %v243
    %v320 = vpop.permute.xlu0 %319
    %vm321 = vcmp.eq.s32.totalorder %v314, %v317
    %vm322 = vcmp.eq.s32.totalorder %v314, %v320
    %v323 = vsel %vm321, %v273, 0.0
    %v324 = vsel %vm322, %v274, 0.0
    %v325 = vsel %vm250, %v323, 0.0
    %326 = vadd.xlane.f32.xlu0 %v325
    %v327 = vpop.xlane.xlu0 %326
    %v328 = vsel %vm250, %v324, 0.0
    %329 = vadd.xlane.f32.xlu0 %v328
    %v330 = vpop.xlane.xlu0 %329
    %v331 = vsub.f32 0.0, %v327
    %v332 = vsub.f32 0.0, %v330
    %v333 = vmul.f32 %v248, %v309
    %v334 = vmul.f32 %v249, %v312
    %v335 = vsel %vm167, %v333, 0.0
    %v336 = vsel %vm167, %v334, 0.0
    %v337 = vadd.f32 %v335, %v336
    %338 = vadd.xlane.f32.xlu0 %v337
    %v339 = vpop.xlane.xlu0 %338
    %v340 = vrot.slane %v339, 4
    %v341 = vadd.f32 %v339, %v340
    %v342 = vrot.slane %v341, 2
    %v343 = vadd.f32 %v341, %v342
    %v344 = vrot.slane %v343, 1
    %v345 = vadd.f32 %v343, %v344
    %s346 = vtos %v345
    %v347 = vstv %s346
    %348 = vst.msk [vmem:[#allocation2] sm:$0x1] %vm195, %v347
    %v349 = vmul.f32 %v248, %v331
    %v350 = vmul.f32 %v249, %v332
    %v351 = vsel %vm167, %v349, 0.0
    %v352 = vsel %vm167, %v350, 0.0
    %v353 = vadd.f32 %v351, %v352
    %354 = vadd.xlane.f32.xlu0 %v353
    %v355 = vpop.xlane.xlu0 %354
    %v356 = vrot.slane %v355, 4
    %v357 = vadd.f32 %v355, %v356
    %v358 = vrot.slane %v357, 2
    %v359 = vadd.f32 %v357, %v358
    %v360 = vrot.slane %v359, 1
    %v361 = vadd.f32 %v359, %v360
    %s362 = vtos %v361
    %v363 = vstv %s362
    %364 = vst.msk [vmem:[#allocation4] sm:$0x1] %vm195, %v363
    // Predicated region
    $region38: #{distillation_forward.1} parent=1 // pred_check
      _
    $region39: #{distillation_forward.1} parent=1 // pred_check_branch
      %366 = sbr.rel (0) target = $region41
    $region40: #{distillation_forward.1} parent=1 // pred_region
      _
    $region41: #{distillation_forward.1} parent=1 // pred_fallthru
      _
    // Predicated region
    $region42: #{distillation_forward.1} parent=1 // pred_check
      _
    $region43: #{distillation_forward.1} parent=1 // pred_check_branch
      %368 = sbr.rel (0) target = $region45
    $region44: #{distillation_forward.1} parent=1 // pred_region
      _
    $region45: #{distillation_forward.1} parent=1 // pred_fallthru
      _
    // Predicated region
    $region46: #{distillation_forward.1} parent=1 // pred_check
      _
    $region47: #{distillation_forward.1} parent=1 // pred_check_branch
      %370 = sbr.rel (0) target = $region49
    $region48: #{distillation_forward.1} parent=1 // pred_region
      %s372 = ssub.s32 16, 16
      %373 = vsyncadd [#allocation3], %s372
      %s375 = sshll.u32 [#allocation2], 4
      %s376 = int_to_ptr.vmem [resolvable:$true] %s375
      %378 = dma.vmem_to_hbm [thread:$0]  %s376, 16, %s11, [#allocation3]
    $region49: #{distillation_forward.1} parent=1 // pred_fallthru
      _
    // Predicated region
    $region50: #{distillation_forward.1} parent=1 // pred_check
      _
    $region51: #{distillation_forward.1} parent=1 // pred_check_branch
      %380 = sbr.rel (0) target = $region53
    $region52: #{distillation_forward.1} parent=1 // pred_region
      %s382 = ssub.s32 16, 16
      %383 = vsyncadd [#allocation5], %s382
      %s385 = sshll.u32 [#allocation4], 4
      %s386 = int_to_ptr.vmem [resolvable:$true] %s385
      %388 = dma.vmem_to_hbm [thread:$0]  %s386, 16, %s12, [#allocation5]
    $region53: #{distillation_forward.1} parent=1 // pred_fallthru
      _
    // Predicated region
    $region54: #{distillation_forward.1} parent=1 // pred_check
      _
    $region55: #{distillation_forward.1} parent=1 // pred_check_branch
      %390 = sbr.rel (0) target = $region57
    $region56: #{distillation_forward.1} parent=1 // pred_region
      _
    $region57: #{distillation_forward.1} parent=1 // pred_fallthru
      _
    // Predicated region
    $region58: #{distillation_forward.1} parent=1 // pred_check
      _
    $region59: #{distillation_forward.1} parent=1 // pred_check_branch
      %392 = sbr.rel (0) target = $region61
    $region60: #{distillation_forward.1} parent=1 // pred_region
      _
    $region61: #{distillation_forward.1} parent=1 // pred_fallthru
      _
    // Predicated region
    $region62: #{distillation_forward.1} parent=1 // pred_check
      _
    $region63: #{distillation_forward.1} parent=1 // pred_check_branch
      %394 = sbr.rel (0) target = $region65
    $region64: #{distillation_forward.1} parent=1 // pred_region
      %395 = dma.done [#allocation3], 16
    $region65: #{distillation_forward.1} parent=1 // pred_fallthru
      _
    // Predicated region
    $region66: #{distillation_forward.1} parent=1 // pred_check
      _
    $region67: #{distillation_forward.1} parent=1 // pred_check_branch
      %397 = sbr.rel (0) target = $region69
    $region68: #{distillation_forward.1} parent=1 // pred_region
      %398 = dma.done [#allocation5], 16
    $region69: #{distillation_forward.1} parent=1 // pred_fallthru
      _
    %399 = vsyncpa [#allocation3], 1
    %400 = vsyncpa [#allocation5], 1

</llo_original>
